<compile_context>
chip_gen: v7x
topology: tpu7x:2x2x1
jax: 0.10.0
libtpu: 0.0.40
codegen_flags: <defaults>
</compile_context>

<pallas_src>
import functools

import jax
import jax.numpy as jnp
from jax.experimental import pallas as pl
from jax.experimental.pallas import tpu as pltpu

_LANE = 128


def _round_up(x, m):
    return ((x + m - 1) // m) * m


def qnetwork_kernel(x_ref, w1_ref, b1_ref, w2_ref, b2_ref, w3_ref, b3_ref, o_ref):
    # Matmul operand dtype follows the (pre-padded, pre-cast) weights; bias + ReLU and
    # the MXU accumulation stay in f32.
    mm_dt = w1_ref.dtype
    x = x_ref[...].astype(mm_dt)

    # Biases read once per grid step (hoisted; no per-loop rebroadcast).
    b1 = b1_ref[...]
    b2 = b2_ref[...]
    b3 = b3_ref[...]

    # Layer 1: Linear(state -> hidden) + ReLU   (MXU matmul, f32 accumulate)
    h1 = jnp.dot(x, w1_ref[...], preferred_element_type=jnp.float32) + b1
    h1 = jnp.maximum(h1, 0.0)

    # Layer 2: Linear(hidden -> hidden) + ReLU
    h2 = jnp.dot(h1.astype(mm_dt), w2_ref[...], preferred_element_type=jnp.float32) + b2
    h2 = jnp.maximum(h2, 0.0)

    # Layer 3: Linear(hidden -> action), no activation.  Output block is the narrow
    # (TM, A) tile -- no lane padding, no post-call slice.
    out = jnp.dot(h2.astype(mm_dt), w3_ref[...], preferred_element_type=jnp.float32) + b3
    o_ref[...] = out.astype(o_ref.dtype)


def prepare_params(params, mm_dtype=jnp.float32):
    """Pad/cast params ONCE (at init or after each parameter update), outside the
    per-forward jitted path.

    Hidden dim is zero-padded to a multiple of 128 (lane-dense matmul N/K dims); the
    padding is mathematically inert through Linear+ReLU (weight cols 0, bias 0,
    relu(0)=0).  The output (action) dim is left unpadded.  Weights may optionally be
    stored in bf16 (f32 accumulate in-kernel); biases always stay f32.
    """
    w1, b1 = params["w1"], params["b1"]
    w2, b2 = params["w2"], params["b2"]
    w3, b3 = params["w3"], params["b3"]

    S, H = w1.shape
    A = w3.shape[1]
    Hp = _round_up(H, _LANE)
    f32 = jnp.float32

    w1p = jnp.zeros((S, Hp), f32).at[:, :H].set(w1).astype(mm_dtype)
    b1p = jnp.zeros((1, Hp), f32).at[:, :H].set(b1.reshape(1, H))
    w2p = jnp.zeros((Hp, Hp), f32).at[:H, :H].set(w2).astype(mm_dtype)
    b2p = jnp.zeros((1, Hp), f32).at[:, :H].set(b2.reshape(1, H))
    w3p = jnp.zeros((Hp, A), f32).at[:H, :].set(w3).astype(mm_dtype)
    b3p = b3.reshape(1, A).astype(f32)

    return {"w1": w1p, "b1": b1p, "w2": w2p, "b2": b2p, "w3": w3p, "b3": b3p}


@functools.partial(jax.jit, static_argnames=("block_m",))
def qnetwork_forward(state, padded_params, block_m=1024):
    """state: [B, state_dim] f32.  padded_params: output of prepare_params()."""
    w1, b1 = padded_params["w1"], padded_params["b1"]
    w2, b2 = padded_params["w2"], padded_params["b2"]
    w3, b3 = padded_params["w3"], padded_params["b3"]

    B, S = state.shape
    Hp = w1.shape[1]
    A = w3.shape[1]
    out_dt = jnp.float32

    # Batch tile: multiple of 8 always; for B > 8 cap at ceil(B/2) so the grid has at
    # least 2 steps (lets ("parallel",) shard across the two v7x TensorCores).
    block_m = _round_up(max(block_m, 8), 8)
    if B > 8:
        TM = min(block_m, _round_up(-(-B // 2), 8))
    else:
        TM = _round_up(B, 8)
    Bp = _round_up(B, TM)

    # Pad the batch only when actually needed (skip the HBM copy when B % TM == 0).
    xp = state if B == Bp else jnp.pad(state, ((0, Bp - B), (0, 0)))

    grid = (Bp // TM,)

    # Weights/biases: constant index_map -> same block every grid step -> loaded once
    # and resident in VMEM across the whole grid.
    def resident(shape):
        return pl.BlockSpec(shape, lambda i, _n=len(shape): (0,) * _n)

    itemsize_w = jnp.dtype(w1.dtype).itemsize
    cost = pl.CostEstimate(
        flops=2 * Bp * (S * Hp + Hp * Hp + Hp * A),
        transcendentals=0,
        bytes_accessed=(
            Bp * S * 4                                    # input
            + (S * Hp + Hp * Hp + Hp * A) * itemsize_w    # weights
            + (2 * Hp + A) * 4                            # biases
            + Bp * A * 4                                  # output
        ),
    )

    # TODO(synk): if xprof shows exposed output-writeback DMA at large B, add
    # pipeline_mode=pl.Buffered(3) to the batch-tiled in/out specs.
    out = pl.pallas_call(
        qnetwork_kernel,
        out_shape=jax.ShapeDtypeStruct((Bp, A), out_dt),
        grid=grid,
        in_specs=[
            pl.BlockSpec((TM, S), lambda i: (i, 0)),      # batch-tiled activations
            resident((S, Hp)), resident((1, Hp)),
            resident((Hp, Hp)), resident((1, Hp)),
            resident((Hp, A)), resident((1, A)),
        ],
        out_specs=pl.BlockSpec((TM, A), lambda i: (i, 0)),  # narrow, unpadded output
        compiler_params=pltpu.CompilerParams(
            dimension_semantics=("parallel",),            # v7x: batch over 2 TCs
        ),
        cost_estimate=cost,
    )(xp, w1, b1, w2, b2, w3, b3)

    return out[:B] if B != Bp else out


def init_params(key, state_dim, action_dim, hidden_dim=64):
    """Deterministic init mimicking nn.Linear's U(-1/sqrt(fan_in), 1/sqrt(fan_in))."""
    ks = jax.random.split(key, 6)

    def linear(kw, kb, fan_in, fan_out):
        bound = 1.0 / jnp.sqrt(jnp.float32(fan_in))
        w = jax.random.uniform(kw, (fan_in, fan_out), jnp.float32, -bound, bound)
        b = jax.random.uniform(kb, (fan_out,), jnp.float32, -bound, bound)
        return w, b

    w1, b1 = linear(ks[0], ks[1], state_dim, hidden_dim)
    w2, b2 = linear(ks[2], ks[3], hidden_dim, hidden_dim)
    w3, b3 = linear(ks[4], ks[5], hidden_dim, action_dim)
    return {"w1": w1, "b1": b1, "w2": w2, "b2": b2, "w3": w3, "b3": b3}


def _reference(state, params):
    h1 = jnp.maximum(state @ params["w1"] + params["b1"], 0.0)
    h2 = jnp.maximum(h1 @ params["w2"] + params["b2"], 0.0)
    return h2 @ params["w3"] + params["b3"]


if __name__ == "__main__":
    key = jax.random.PRNGKey(0)
    k_params, k_state1, k_state2 = jax.random.split(key, 3)

    state_dim, action_dim, hidden_dim = 16, 8, 64
    params = init_params(k_params, state_dim, action_dim, hidden_dim)
    padded_params = prepare_params(params)            # pad once, outside forward

    # Small batch (single tile, no batch padding).
    state_small = jax.random.normal(k_state1, (8, state_dim), jnp.float32)
    out_small = jax.block_until_ready(qnetwork_forward(state_small, padded_params))
    assert out_small.shape == (8, action_dim)
    assert jnp.allclose(out_small, _reference(state_small, params), atol=1e-5, rtol=1e-5)

    # Larger batch exercising multi-tile grid (>=2 steps) + ragged batch padding.
    state_big = jax.random.normal(k_state2, (300, state_dim), jnp.float32)
    out_big = jax.block_until_ready(qnetwork_forward(state_big, padded_params, block_m=128))
    assert out_big.shape == (300, action_dim)
    assert jnp.allclose(out_big, _reference(state_big, params), atol=1e-5, rtol=1e-5)

    # Optional bf16-matmul / f32-accumulate path (not bit-exact vs f32 reference).
    padded_bf16 = prepare_params(params, mm_dtype=jnp.bfloat16)
    out_bf16 = jax.block_until_ready(qnetwork_forward(state_big, padded_bf16))
    assert out_bf16.shape == (300, action_dim)
    assert jnp.allclose(out_bf16, _reference(state_big, params), atol=5e-2, rtol=5e-2)

    print("KERNEL_OK")
</pallas_src>

<mosaic_0001>
module attributes {stable_mosaic.version = 11 : i64} {
  func.func @qnetwork_kernel(%arg0: i32, %arg1: memref<8x16xf32, #tpu.memory_space<vmem>>, %arg2: memref<16x128xf32, #tpu.memory_space<vmem>>, %arg3: memref<1x128xf32, #tpu.memory_space<vmem>>, %arg4: memref<128x128xf32, #tpu.memory_space<vmem>>, %arg5: memref<1x128xf32, #tpu.memory_space<vmem>>, %arg6: memref<128x8xf32, #tpu.memory_space<vmem>>, %arg7: memref<1x8xf32, #tpu.memory_space<vmem>>, %arg8: memref<8x8xf32, #tpu.memory_space<vmem>>) attributes {dimension_semantics = [#tpu.dimension_semantics<parallel>], iteration_bounds = array<i64: 1>, scalar_prefetch = 0 : i64, scratch_operands = 0 : i64, tpu.core_type = #tpu.core_type<tc>, window_params = [{transform_indices = @transform_0, window_bounds = array<i64: 8, 16>}, {pipeline_mode = #tpu.pipeline_mode<synchronous>, transform_indices = @transform_1, window_bounds = array<i64: 16, 128>}, {pipeline_mode = #tpu.pipeline_mode<synchronous>, transform_indices = @transform_2, window_bounds = array<i64: 1, 128>}, {pipeline_mode = #tpu.pipeline_mode<synchronous>, transform_indices = @transform_3, window_bounds = array<i64: 128, 128>}, {pipeline_mode = #tpu.pipeline_mode<synchronous>, transform_indices = @transform_4, window_bounds = array<i64: 1, 128>}, {pipeline_mode = #tpu.pipeline_mode<synchronous>, transform_indices = @transform_5, window_bounds = array<i64: 128, 8>}, {pipeline_mode = #tpu.pipeline_mode<synchronous>, transform_indices = @transform_6, window_bounds = array<i64: 1, 8>}, {transform_indices = @transform_7, window_bounds = array<i64: 8, 8>}]} {
    %c0 = arith.constant 0 : index
    %c0_0 = arith.constant 0 : index
    %0 = vector.load %arg1[%c0, %c0_0] : memref<8x16xf32, #tpu.memory_space<vmem>>, vector<8x16xf32>
    %c0_1 = arith.constant 0 : index
    %c0_2 = arith.constant 0 : index
    %1 = vector.load %arg3[%c0_1, %c0_2] : memref<1x128xf32, #tpu.memory_space<vmem>>, vector<1x128xf32>
    %c0_3 = arith.constant 0 : index
    %c0_4 = arith.constant 0 : index
    %2 = vector.load %arg5[%c0_3, %c0_4] : memref<1x128xf32, #tpu.memory_space<vmem>>, vector<1x128xf32>
    %c0_5 = arith.constant 0 : index
    %c0_6 = arith.constant 0 : index
    %3 = vector.load %arg7[%c0_5, %c0_6] : memref<1x8xf32, #tpu.memory_space<vmem>>, vector<1x8xf32>
    %c0_7 = arith.constant 0 : index
    %c0_8 = arith.constant 0 : index
    %4 = vector.load %arg2[%c0_7, %c0_8] : memref<16x128xf32, #tpu.memory_space<vmem>>, vector<16x128xf32>
    %cst = arith.constant dense<0.000000e+00> : vector<8x128xf32>
    %5 = tpu.matmul %0, %4, %cst {dimension_numbers = #tpu.dot_dimension_numbers<[1], [0], [0], [1], [0, 0, 1, 1], [], []>} : vector<8x16xf32>, vector<16x128xf32>, vector<8x128xf32> -> vector<8x128xf32>
    %6 = vector.broadcast %1 : vector<1x128xf32> to vector<8x128xf32>
    %7 = arith.addf %5, %6 : vector<8x128xf32>
    %cst_9 = arith.constant 0.000000e+00 : f32
    %8 = vector.broadcast %cst_9 : f32 to vector<8x128xf32>
    %9 = arith.maximumf %7, %8 : vector<8x128xf32>
    %c0_10 = arith.constant 0 : index
    %c0_11 = arith.constant 0 : index
    %10 = vector.load %arg4[%c0_10, %c0_11] : memref<128x128xf32, #tpu.memory_space<vmem>>, vector<128x128xf32>
    %cst_12 = arith.constant dense<0.000000e+00> : vector<8x128xf32>
    %11 = tpu.matmul %9, %10, %cst_12 {dimension_numbers = #tpu.dot_dimension_numbers<[1], [0], [0], [1], [0, 0, 1, 1], [], []>} : vector<8x128xf32>, vector<128x128xf32>, vector<8x128xf32> -> vector<8x128xf32>
    %12 = vector.broadcast %2 : vector<1x128xf32> to vector<8x128xf32>
    %13 = arith.addf %11, %12 : vector<8x128xf32>
    %cst_13 = arith.constant 0.000000e+00 : f32
    %14 = vector.broadcast %cst_13 : f32 to vector<8x128xf32>
    %15 = arith.maximumf %13, %14 : vector<8x128xf32>
    %c0_14 = arith.constant 0 : index
    %c0_15 = arith.constant 0 : index
    %16 = vector.load %arg6[%c0_14, %c0_15] : memref<128x8xf32, #tpu.memory_space<vmem>>, vector<128x8xf32>
    %cst_16 = arith.constant dense<0.000000e+00> : vector<8x8xf32>
    %17 = tpu.matmul %15, %16, %cst_16 {dimension_numbers = #tpu.dot_dimension_numbers<[1], [0], [0], [1], [0, 0, 1, 1], [], []>} : vector<8x128xf32>, vector<128x8xf32>, vector<8x8xf32> -> vector<8x8xf32>
    %18 = vector.broadcast %3 : vector<1x8xf32> to vector<8x8xf32>
    %19 = arith.addf %17, %18 : vector<8x8xf32>
    %c0_17 = arith.constant 0 : index
    %c0_18 = arith.constant 0 : index
    %20 = vector.load %arg8[%c0_17, %c0_18] : memref<8x8xf32, #tpu.memory_space<vmem>>, vector<8x8xf32>
    tpu.vector_store %arg8[%c0_17, %c0_18], %19 {strides = array<i32>} : memref<8x8xf32, #tpu.memory_space<vmem>>, vector<8x8xf32>,
    return
  }
  func.func @transform_0(%arg0: i32) -> (i32, i32) {
    %c0_i32 = arith.constant 0 : i32
    %c0_i32_0 = arith.constant 0 : i32
    return %arg0, %c0_i32 : i32, i32
  }
  func.func @transform_1(%arg0: i32) -> (i32, i32) {
    %c0_i32 = arith.constant 0 : i32
    %c0_i32_0 = arith.constant 0 : i32
    %c0_i32_1 = arith.constant 0 : i32
    return %c0_i32, %c0_i32_0 : i32, i32
  }
  func.func @transform_2(%arg0: i32) -> (i32, i32) {
    %c0_i32 = arith.constant 0 : i32
    %c0_i32_0 = arith.constant 0 : i32
    %c0_i32_1 = arith.constant 0 : i32
    return %c0_i32, %c0_i32_0 : i32, i32
  }
  func.func @transform_3(%arg0: i32) -> (i32, i32) {
    %c0_i32 = arith.constant 0 : i32
    %c0_i32_0 = arith.constant 0 : i32
    %c0_i32_1 = arith.constant 0 : i32
    return %c0_i32, %c0_i32_0 : i32, i32
  }
  func.func @transform_4(%arg0: i32) -> (i32, i32) {
    %c0_i32 = arith.constant 0 : i32
    %c0_i32_0 = arith.constant 0 : i32
    %c0_i32_1 = arith.constant 0 : i32
    return %c0_i32, %c0_i32_0 : i32, i32
  }
  func.func @transform_5(%arg0: i32) -> (i32, i32) {
    %c0_i32 = arith.constant 0 : i32
    %c0_i32_0 = arith.constant 0 : i32
    %c0_i32_1 = arith.constant 0 : i32
    return %c0_i32, %c0_i32_0 : i32, i32
  }
  func.func @transform_6(%arg0: i32) -> (i32, i32) {
    %c0_i32 = arith.constant 0 : i32
    %c0_i32_0 = arith.constant 0 : i32
    %c0_i32_1 = arith.constant 0 : i32
    return %c0_i32, %c0_i32_0 : i32, i32
  }
  func.func @transform_7(%arg0: i32) -> (i32, i32) {
    %c0_i32 = arith.constant 0 : i32
    %c0_i32_0 = arith.constant 0 : i32
    return %arg0, %c0_i32 : i32, i32
  }
}

</mosaic_0001>

<llo_original>
// kernel: qnetwork_forward.1
$region0: #{qnetwork_forward.1}
  #allocation0 [shape = 'u32[]', space=smem, size = 0x4, offset = 0x4, fixed_abs, tag = 'smem constant byte address 0x4 - core index']
  #allocation1 [shape = 'u32[144,128]{1,0:T(1,128)}', space=vmem, size = 0x12000, scoped, tag = 'internal scratch']
  %s0 = inlined_call_operand.hbm [shape: f32[8,16], index: 0, kind: input, shape index: {}]
  %s1 = inlined_call_operand.vmem [shape: f32[16,128], index: 1, kind: input, shape index: {}]
  %s2 = inlined_call_operand.vmem [shape: f32[1,128], index: 2, kind: input, shape index: {}]
  %s3 = inlined_call_operand.vmem [shape: f32[128,128], index: 3, kind: input, shape index: {}]
  %s4 = inlined_call_operand.vmem [shape: f32[1,128], index: 4, kind: input, shape index: {}]
  %s5 = inlined_call_operand.vmem [shape: f32[128,8], index: 5, kind: input, shape index: {}]
  %s6 = inlined_call_operand.vmem [shape: f32[1,8], index: 6, kind: input, shape index: {}]
  %s7 = inlined_call_operand.hbm [shape: f32[8,8], index: 7, kind: output, shape index: {}]
  %s8 = sld [smem:[#allocation0]]
  $region42: #{qnetwork_forward.1} parent=0
    _
  %s10 = ssub.s32 1, %s8
  %s11 = scalar_select 0, %s10, %s8
  $region1: #{qnetwork_forward.1} parent=0
    #allocation2 [shape = 'u8[4096]{0}', space=vmem, size = 0x1000, scoped, tag = 'input window, operand 0, single buffered']
    #allocation3 [shape = 's32[1]{0}', space=sflag, size = 0x4, scoped, tag = 'scoped memory for qnetwork_forward.1']
    #allocation4 [shape = 's32[1]{0}', space=sflag, size = 0x4, scoped, tag = 'scoped memory for qnetwork_forward.1']
    #allocation5 [shape = 'u8[4096]{0}', space=vmem, size = 0x1000, scoped, tag = 'output window, operand 0, single buffered']
    %12 = vsyncpa [#allocation3], 0
    %13 = vsyncpa [#allocation4], 0
    // Predicated region
    $region2: #{qnetwork_forward.1} parent=1 // pred_check
      _
    $region3: #{qnetwork_forward.1} parent=1 // pred_check_branch
      %15 = sbr.rel (0) target = $region5
    $region4: #{qnetwork_forward.1} parent=1 // pred_region
      %s17 = ssub.s32 128, 128
      %18 = vsyncadd [#allocation3], %s17
      %s20 = sshll.u32 [#allocation2], 4
      %s21 = int_to_ptr.vmem [resolvable:$true] %s20
      %23 = dma.hbm_to_vmem [thread:$0]  %s0, 128, %s21, [#allocation3]
    $region5: #{qnetwork_forward.1} parent=1 // pred_fallthru
      _
    // Predicated region
    $region6: #{qnetwork_forward.1} parent=1 // pred_check
      _
    $region7: #{qnetwork_forward.1} parent=1 // pred_check_branch
      %25 = sbr.rel (0) target = $region9
    $region8: #{qnetwork_forward.1} parent=1 // pred_region
      _
    $region9: #{qnetwork_forward.1} parent=1 // pred_fallthru
      _
    // Predicated region
    $region10: #{qnetwork_forward.1} parent=1 // pred_check
      _
    $region11: #{qnetwork_forward.1} parent=1 // pred_check_branch
      %27 = sbr.rel (0) target = $region13
    $region12: #{qnetwork_forward.1} parent=1 // pred_region
      _
    $region13: #{qnetwork_forward.1} parent=1 // pred_fallthru
      _
    // Predicated region
    $region14: #{qnetwork_forward.1} parent=1 // pred_check
      _
    $region15: #{qnetwork_forward.1} parent=1 // pred_check_branch
      %29 = sbr.rel (0) target = $region17
    $region16: #{qnetwork_forward.1} parent=1 // pred_region
      _
    $region17: #{qnetwork_forward.1} parent=1 // pred_fallthru
      _
    // Predicated region
    $region18: #{qnetwork_forward.1} parent=1 // pred_check
      _
    $region19: #{qnetwork_forward.1} parent=1 // pred_check_branch
      %31 = sbr.rel (0) target = $region21
    $region20: #{qnetwork_forward.1} parent=1 // pred_region
      _
    $region21: #{qnetwork_forward.1} parent=1 // pred_fallthru
      _
    // Predicated region
    $region22: #{qnetwork_forward.1} parent=1 // pred_check
      _
    $region23: #{qnetwork_forward.1} parent=1 // pred_check_branch
      %33 = sbr.rel (0) target = $region25
    $region24: #{qnetwork_forward.1} parent=1 // pred_region
      _
    $region25: #{qnetwork_forward.1} parent=1 // pred_fallthru
      _
    // Predicated region
    $region26: #{qnetwork_forward.1} parent=1 // pred_check
      _
    $region27: #{qnetwork_forward.1} parent=1 // pred_check_branch
      %35 = sbr.rel (0) target = $region29
    $region28: #{qnetwork_forward.1} parent=1 // pred_region
      _
    $region29: #{qnetwork_forward.1} parent=1 // pred_fallthru
      _
    // Predicated region
    $region30: #{qnetwork_forward.1} parent=1 // pred_check
      _
    $region31: #{qnetwork_forward.1} parent=1 // pred_check_branch
      %37 = sbr.rel (0) target = $region33
    $region32: #{qnetwork_forward.1} parent=1 // pred_region
      %38 = dma.done [#allocation3], 128
    $region33: #{qnetwork_forward.1} parent=1 // pred_fallthru
      _
    %v39 = vld [vmem:[#allocation2] sm:$0xff]
    %v40 = vld [vmem:[%s2] sm:$0x1]
    %v41 = vld [vmem:[%s4] sm:$0x1]
    %v42 = vld [vmem:[%s6] sm:$0x1]
    %v43 = vld [vmem:[%s1] sm:$0xff]
    %v44 = vld [vmem:[%s1 + $0x8] sm:$0xff]
    %v46 = vlaneseq
    %v47 = vshrl.u32 %v46, 7
    %v48 = vsub.s32 0, %v47
    %v49 = vrot.slane %v40, %v48
    %vm51 = vcmask 130048
    %v53 = vsel %vm51, %v39, 0
    %55 = vmatprep.subr.mxu0 0.0
    %56 = vmatpush1.msra.mxu0 %v43
    %57 = vmatprep.subr.mxu0 0.0
    %58 = vmatpush1.msra.mxu0 %v44
    %59 = vmatprep.subr.mxu0 0.0
    %60 = vmatpush1.msra.mxu0 0.0
    %61 = vmatprep.subr.mxu0 0.0
    %62 = vmatpush1.msra.mxu0 0.0
    %63 = vmatprep.subr.mxu0 0.0
    %64 = vmatpush1.msra.mxu0 0.0
    %65 = vmatprep.subr.mxu0 0.0
    %66 = vmatpush1.msra.mxu0 0.0
    %67 = vmatprep.subr.mxu0 0.0
    %68 = vmatpush1.msra.mxu0 0.0
    %69 = vmatprep.subr.mxu0 0.0
    %70 = vmatpush1.msra.mxu0 0.0
    %71 = vmatprep.subr.mxu0 0.0
    %72 = vmatpush1.msra.mxu0 0.0
    %73 = vmatprep.subr.mxu0 0.0
    %74 = vmatpush1.msra.mxu0 0.0
    %75 = vmatprep.subr.mxu0 0.0
    %76 = vmatpush1.msra.mxu0 0.0
    %77 = vmatprep.subr.mxu0 0.0
    %78 = vmatpush1.msra.mxu0 0.0
    %79 = vmatprep.subr.mxu0 0.0
    %80 = vmatpush1.msra.mxu0 0.0
    %81 = vmatprep.subr.mxu0 0.0
    %82 = vmatpush1.msra.mxu0 0.0
    %83 = vmatprep.subr.mxu0 0.0
    %84 = vmatpush1.msra.mxu0 0.0
    %85 = vmatprep.subr.mxu0 0.0
    %86 = vmatpush1.msra.mxu0 0.0
    %87 = vmatprep.subr.mxu0 0.0
    %88 = vmatpush1.msra.mxu0 0.0
    %89 = vmatprep.subr.mxu0 0.0
    %90 = vmatpush1.msra.mxu0 0.0
    %91 = vmatprep.subr.mxu0 0.0
    %92 = vmatpush1.msra.mxu0 0.0
    %93 = vmatprep.subr.mxu0 0.0
    %94 = vmatpush1.msra.mxu0 0.0
    %95 = vmatprep.subr.mxu0 0.0
    %96 = vmatpush1.msra.mxu0 0.0
    %97 = vmatprep.subr.mxu0 0.0
    %98 = vmatpush1.msra.mxu0 0.0
    %99 = vmatprep.subr.mxu0 0.0
    %100 = vmatpush1.msra.mxu0 0.0
    %101 = vmatprep.subr.mxu0 0.0
    %102 = vmatpush1.msra.mxu0 0.0
    %103 = vmatprep.subr.mxu0 0.0
    %104 = vmatpush1.msra.mxu0 0.0
    %105 = vmatprep.subr.mxu0 0.0
    %106 = vmatpush1.msra.mxu0 0.0
    %107 = vmatprep.subr.mxu0 0.0
    %108 = vmatpush1.msra.mxu0 0.0
    %109 = vmatprep.subr.mxu0 0.0
    %110 = vmatpush1.msra.mxu0 0.0
    %111 = vmatprep.subr.mxu0 0.0
    %112 = vmatpush1.msra.mxu0 0.0
    %113 = vmatprep.subr.mxu0 0.0
    %114 = vmatpush1.msra.mxu0 0.0
    %115 = vmatprep.subr.mxu0 0.0
    %116 = vmatpush1.msra.mxu0 0.0
    %117 = vmatprep.subr.mxu0 0.0
    %118 = vmatpush1.msra.mxu0 0.0
    %119 = vmatprep.mubr.f32.mxu0 0.0
    %120 = vmatmul.mubr.f32.gmra.mrb[0].mxu0 %v53
    %v121 = vpop.f32.mrb[0].mxu0
    %v122 = vadd.f32 %v49, %v121
    %v123 = vpop.f32.mrb[0].mxu0
    %124 = vdwg.mxu0
    %v125 = vmax.f32 %v122, 0.0
    %v126 = vld [vmem:[%s3] sm:$0xff]
    %v127 = vld [vmem:[%s3 + $0x8] sm:$0xff]
    %v128 = vld [vmem:[%s3 + $0x10] sm:$0xff]
    %v129 = vld [vmem:[%s3 + $0x18] sm:$0xff]
    %v130 = vld [vmem:[%s3 + $0x20] sm:$0xff]
    %v131 = vld [vmem:[%s3 + $0x28] sm:$0xff]
    %v132 = vld [vmem:[%s3 + $0x30] sm:$0xff]
    %v133 = vld [vmem:[%s3 + $0x38] sm:$0xff]
    %v134 = vld [vmem:[%s3 + $0x40] sm:$0xff]
    %v135 = vld [vmem:[%s3 + $0x48] sm:$0xff]
    %v136 = vld [vmem:[%s3 + $0x50] sm:$0xff]
    %v137 = vld [vmem:[%s3 + $0x58] sm:$0xff]
    %v138 = vld [vmem:[%s3 + $0x60] sm:$0xff]
    %v139 = vld [vmem:[%s3 + $0x68] sm:$0xff]
    %v140 = vld [vmem:[%s3 + $0x70] sm:$0xff]
    %v141 = vld [vmem:[%s3 + $0x78] sm:$0xff]
    %v143 = vlaneseq
    %v144 = vshrl.u32 %v143, 7
    %v145 = vsub.s32 0, %v144
    %v146 = vrot.slane %v41, %v145
    %148 = vmatprep.subr.mxu0 0.0
    %149 = vmatpush1.msra.mxu0 %v126
    %150 = vmatprep.subr.mxu0 0.0
    %151 = vmatpush1.msra.mxu0 %v127
    %152 = vmatprep.subr.mxu0 0.0
    %153 = vmatpush1.msra.mxu0 %v128
    %154 = vmatprep.subr.mxu0 0.0
    %155 = vmatpush1.msra.mxu0 %v129
    %156 = vmatprep.subr.mxu0 0.0
    %157 = vmatpush1.msra.mxu0 %v130
    %158 = vmatprep.subr.mxu0 0.0
    %159 = vmatpush1.msra.mxu0 %v131
    %160 = vmatprep.subr.mxu0 0.0
    %161 = vmatpush1.msra.mxu0 %v132
    %162 = vmatprep.subr.mxu0 0.0
    %163 = vmatpush1.msra.mxu0 %v133
    %164 = vmatprep.subr.mxu0 0.0
    %165 = vmatpush1.msra.mxu0 %v134
    %166 = vmatprep.subr.mxu0 0.0
    %167 = vmatpush1.msra.mxu0 %v135
    %168 = vmatprep.subr.mxu0 0.0
    %169 = vmatpush1.msra.mxu0 %v136
    %170 = vmatprep.subr.mxu0 0.0
    %171 = vmatpush1.msra.mxu0 %v137
    %172 = vmatprep.subr.mxu0 0.0
    %173 = vmatpush1.msra.mxu0 %v138
    %174 = vmatprep.subr.mxu0 0.0
    %175 = vmatpush1.msra.mxu0 %v139
    %176 = vmatprep.subr.mxu0 0.0
    %177 = vmatpush1.msra.mxu0 %v140
    %178 = vmatprep.subr.mxu0 0.0
    %179 = vmatpush1.msra.mxu0 %v141
    %180 = vmatprep.subr.mxu0 0.0
    %181 = vmatpush1.msra.mxu0 0.0
    %182 = vmatprep.subr.mxu0 0.0
    %183 = vmatpush1.msra.mxu0 0.0
    %184 = vmatprep.subr.mxu0 0.0
    %185 = vmatpush1.msra.mxu0 0.0
    %186 = vmatprep.subr.mxu0 0.0
    %187 = vmatpush1.msra.mxu0 0.0
    %188 = vmatprep.subr.mxu0 0.0
    %189 = vmatpush1.msra.mxu0 0.0
    %190 = vmatprep.subr.mxu0 0.0
    %191 = vmatpush1.msra.mxu0 0.0
    %192 = vmatprep.subr.mxu0 0.0
    %193 = vmatpush1.msra.mxu0 0.0
    %194 = vmatprep.subr.mxu0 0.0
    %195 = vmatpush1.msra.mxu0 0.0
    %196 = vmatprep.subr.mxu0 0.0
    %197 = vmatpush1.msra.mxu0 0.0
    %198 = vmatprep.subr.mxu0 0.0
    %199 = vmatpush1.msra.mxu0 0.0
    %200 = vmatprep.subr.mxu0 0.0
    %201 = vmatpush1.msra.mxu0 0.0
    %202 = vmatprep.subr.mxu0 0.0
    %203 = vmatpush1.msra.mxu0 0.0
    %204 = vmatprep.subr.mxu0 0.0
    %205 = vmatpush1.msra.mxu0 0.0
    %206 = vmatprep.subr.mxu0 0.0
    %207 = vmatpush1.msra.mxu0 0.0
    %208 = vmatprep.subr.mxu0 0.0
    %209 = vmatpush1.msra.mxu0 0.0
    %210 = vmatprep.subr.mxu0 0.0
    %211 = vmatpush1.msra.mxu0 0.0
    %212 = vmatprep.mubr.f32.mxu0 0.0
    %213 = vmatmul.mubr.f32.gmra.mrb[0].mxu0 %v125
    %v214 = vpop.f32.mrb[0].mxu0
    %v215 = vadd.f32 %v146, %v214
    %v216 = vpop.f32.mrb[0].mxu0
    %217 = vdwg.mxu0
    %v218 = vmax.f32 %v215, 0.0
    %v219 = vld [vmem:[%s5] sm:$0xff]
    %v220 = vld [vmem:[%s5 + $0x8] sm:$0xff]
    %v221 = vld [vmem:[%s5 + $0x10] sm:$0xff]
    %v222 = vld [vmem:[%s5 + $0x18] sm:$0xff]
    %v223 = vld [vmem:[%s5 + $0x20] sm:$0xff]
    %v224 = vld [vmem:[%s5 + $0x28] sm:$0xff]
    %v225 = vld [vmem:[%s5 + $0x30] sm:$0xff]
    %v226 = vld [vmem:[%s5 + $0x38] sm:$0xff]
    %v227 = vld [vmem:[%s5 + $0x40] sm:$0xff]
    %v228 = vld [vmem:[%s5 + $0x48] sm:$0xff]
    %v229 = vld [vmem:[%s5 + $0x50] sm:$0xff]
    %v230 = vld [vmem:[%s5 + $0x58] sm:$0xff]
    %v231 = vld [vmem:[%s5 + $0x60] sm:$0xff]
    %v232 = vld [vmem:[%s5 + $0x68] sm:$0xff]
    %v233 = vld [vmem:[%s5 + $0x70] sm:$0xff]
    %v234 = vld [vmem:[%s5 + $0x78] sm:$0xff]
    %v236 = vlaneseq
    %v237 = vshrl.u32 %v236, 7
    %v238 = vsub.s32 0, %v237
    %v239 = vrot.slane %v42, %v238
    %241 = vmatprep.subr.mxu0 0.0
    %242 = vmatpush1.msra.mxu0 %v219
    %243 = vmatprep.subr.mxu0 0.0
    %244 = vmatpush1.msra.mxu0 %v220
    %245 = vmatprep.subr.mxu0 0.0
    %246 = vmatpush1.msra.mxu0 %v221
    %247 = vmatprep.subr.mxu0 0.0
    %248 = vmatpush1.msra.mxu0 %v222
    %249 = vmatprep.subr.mxu0 0.0
    %250 = vmatpush1.msra.mxu0 %v223
    %251 = vmatprep.subr.mxu0 0.0
    %252 = vmatpush1.msra.mxu0 %v224
    %253 = vmatprep.subr.mxu0 0.0
    %254 = vmatpush1.msra.mxu0 %v225
    %255 = vmatprep.subr.mxu0 0.0
    %256 = vmatpush1.msra.mxu0 %v226
    %257 = vmatprep.subr.mxu0 0.0
    %258 = vmatpush1.msra.mxu0 %v227
    %259 = vmatprep.subr.mxu0 0.0
    %260 = vmatpush1.msra.mxu0 %v228
    %261 = vmatprep.subr.mxu0 0.0
    %262 = vmatpush1.msra.mxu0 %v229
    %263 = vmatprep.subr.mxu0 0.0
    %264 = vmatpush1.msra.mxu0 %v230
    %265 = vmatprep.subr.mxu0 0.0
    %266 = vmatpush1.msra.mxu0 %v231
    %267 = vmatprep.subr.mxu0 0.0
    %268 = vmatpush1.msra.mxu0 %v232
    %269 = vmatprep.subr.mxu0 0.0
    %270 = vmatpush1.msra.mxu0 %v233
    %271 = vmatprep.subr.mxu0 0.0
    %272 = vmatpush1.msra.mxu0 %v234
    %273 = vmatprep.subr.mxu0 0.0
    %274 = vmatpush1.msra.mxu0 0.0
    %275 = vmatprep.subr.mxu0 0.0
    %276 = vmatpush1.msra.mxu0 0.0
    %277 = vmatprep.subr.mxu0 0.0
    %278 = vmatpush1.msra.mxu0 0.0
    %279 = vmatprep.subr.mxu0 0.0
    %280 = vmatpush1.msra.mxu0 0.0
    %281 = vmatprep.subr.mxu0 0.0
    %282 = vmatpush1.msra.mxu0 0.0
    %283 = vmatprep.subr.mxu0 0.0
    %284 = vmatpush1.msra.mxu0 0.0
    %285 = vmatprep.subr.mxu0 0.0
    %286 = vmatpush1.msra.mxu0 0.0
    %287 = vmatprep.subr.mxu0 0.0
    %288 = vmatpush1.msra.mxu0 0.0
    %289 = vmatprep.subr.mxu0 0.0
    %290 = vmatpush1.msra.mxu0 0.0
    %291 = vmatprep.subr.mxu0 0.0
    %292 = vmatpush1.msra.mxu0 0.0
    %293 = vmatprep.subr.mxu0 0.0
    %294 = vmatpush1.msra.mxu0 0.0
    %295 = vmatprep.subr.mxu0 0.0
    %296 = vmatpush1.msra.mxu0 0.0
    %297 = vmatprep.subr.mxu0 0.0
    %298 = vmatpush1.msra.mxu0 0.0
    %299 = vmatprep.subr.mxu0 0.0
    %300 = vmatpush1.msra.mxu0 0.0
    %301 = vmatprep.subr.mxu0 0.0
    %302 = vmatpush1.msra.mxu0 0.0
    %303 = vmatprep.subr.mxu0 0.0
    %304 = vmatpush1.msra.mxu0 0.0
    %305 = vmatprep.mubr.f32.mxu0 0.0
    %306 = vmatmul.mubr.f32.gmra.mrb[0].mxu0 %v218
    %v307 = vpop.f32.mrb[0].mxu0
    %v308 = vadd.f32 %v239, %v307
    %v309 = vpop.f32.mrb[0].mxu0
    %310 = vdwg.mxu0
    %vm311 = vcmask 64512
    %312 = vst.msk [vmem:[#allocation5] sm:$0xff] %vm311, %v308
    // Predicated region
    $region34: #{qnetwork_forward.1} parent=1 // pred_check
      _
    $region35: #{qnetwork_forward.1} parent=1 // pred_check_branch
      %314 = sbr.rel (0) target = $region37
    $region36: #{qnetwork_forward.1} parent=1 // pred_region
      %s316 = ssub.s32 128, 128
      %317 = vsyncadd [#allocation4], %s316
      %s319 = sshll.u32 [#allocation5], 4
      %s320 = int_to_ptr.vmem [resolvable:$true] %s319
      %322 = dma.vmem_to_hbm [thread:$0]  %s320, 128, %s7, [#allocation4]
    $region37: #{qnetwork_forward.1} parent=1 // pred_fallthru
      _
    // Predicated region
    $region38: #{qnetwork_forward.1} parent=1 // pred_check
      _
    $region39: #{qnetwork_forward.1} parent=1 // pred_check_branch
      %324 = sbr.rel (0) target = $region41
    $region40: #{qnetwork_forward.1} parent=1 // pred_region
      %325 = dma.done [#allocation4], 128
    $region41: #{qnetwork_forward.1} parent=1 // pred_fallthru
      _
    %326 = vsyncpa [#allocation3], 1
    %327 = vsyncpa [#allocation4], 1

</llo_original>
